<compile_context>
chip_gen: v6e
topology: v6e:2x2x1
jax: 0.10.0
libtpu: 0.0.40
codegen_flags: <defaults>
</compile_context>

<pallas_src>
import functools
import math

import numpy as np

import jax
import jax.numpy as jnp
from jax.experimental import pallas as pl
from jax.experimental.pallas import tpu as pltpu


def _round_up(x: int, m: int) -> int:
    return (x + m - 1) // m * m


def _largest_div_tile(total: int, cap: int, unit: int = 128) -> int:
    """Largest multiple of `unit` that is <= cap and divides `total`
    (`total` is itself a multiple of `unit`)."""
    t = max(unit, min((cap // unit) * unit, total))
    while total % t:
        t -= unit
    return t


@functools.lru_cache(maxsize=1)
def _vmem_capacity_bytes() -> int:
    try:
        cap = getattr(pltpu.get_tpu_info(), "vmem_capacity_bytes", None)
        if cap:
            return int(cap)
    except Exception:
        pass
    return 64 << 20          # conservative fallback: v7x per-TensorCore VMEM


@functools.lru_cache(maxsize=8)
def _fused_basis(n_frames: int, n_bins: int, k_pad: int, n_pad: int,
                 dtype_name: str):
    """Fused C2R basis, shape (k_pad, n_pad), built in float64 on the host.

    Rows [0, n_bins)          :  w_k * cos(2*pi*k*n/N)
    Rows [n_bins, 2*n_bins)   : -w_k * sin(2*pi*k*n/N)
    Remaining rows / columns  :  zero padding.
    No 1/N factor: it cancels exactly against the module's `mag * n_frames`.
    """
    k = np.arange(n_bins, dtype=np.int64)[:, None]
    n = np.arange(n_frames, dtype=np.int64)[None, :]
    # (k*n) mod N in int64 keeps the angle exact for arbitrarily large N.
    ang = (2.0 * np.pi / float(n_frames)) * ((k * n) % n_frames).astype(np.float64)
    w = np.full((n_bins, 1), 2.0, dtype=np.float64)
    w[0, 0] = 1.0                                          # DC counted once
    if n_frames % 2 == 0 and n_bins - 1 == n_frames // 2:
        w[n_frames // 2, 0] = 1.0                          # Nyquist counted once
    basis = np.concatenate([w * np.cos(ang), -(w * np.sin(ang))], axis=0)
    full = np.zeros((k_pad, n_pad), dtype=np.float64)
    full[: 2 * n_bins, :n_frames] = basis
    return jnp.asarray(full.astype(dtype_name))            # uploaded once, cached


# ----------------------------- kernels ------------------------------------ #

def _matmul_kernel(rim_ref, basis_ref, o_ref, acc_ref):
    """K-tiled matmul with f32 accumulator (K axis = grid axis 2, 'arbitrary')."""
    @pl.when(pl.program_id(2) == 0)
    def _init():
        acc_ref[...] = jnp.zeros_like(acc_ref)

    acc_ref[...] += jnp.dot(rim_ref[...], basis_ref[...],
                            preferred_element_type=jnp.float32)

    @pl.when(pl.program_id(2) == pl.num_programs(2) - 1)
    def _store():
        o_ref[...] = acc_ref[...].astype(o_ref.dtype)


def _matmul_kernel_single(rim_ref, basis_ref, o_ref):
    """Whole contraction fits in one tile: no accumulator round trip."""
    o_ref[...] = jnp.dot(rim_ref[...], basis_ref[...],
                         preferred_element_type=jnp.float32).astype(o_ref.dtype)


# --------------------------- jitted wrapper -------------------------------- #

@functools.partial(
    jax.jit,
    static_argnames=("n_frames", "n_bins", "b_pad", "n_pad", "k_pad",
                     "bb", "bn", "kt", "vmem_limit"))
def _fourier_signal_impl(mag, phase, basis, *, n_frames, n_bins, b_pad, n_pad,
                         k_pad, bb, bn, kt, vmem_limit):
    B = mag.shape[0]
    out_dtype = mag.dtype

    # rim = [mag*cos(phase) | mag*sin(phase)], packed contiguously (K = 2*n_bins
    # before padding). Built once per call in XLA, not per frame tile.
    magf = mag.astype(jnp.float32)
    phf = phase.astype(jnp.float32)
    rim = jnp.concatenate([magf * jnp.cos(phf), magf * jnp.sin(phf)], axis=1)
    rim = jnp.pad(rim, ((0, b_pad - B), (0, k_pad - 2 * n_bins)))
    rim = rim.astype(basis.dtype)

    nk = k_pad // kt
    grid = (b_pad // bb, n_pad // bn, nk)        # batch, frames, contraction

    in_specs = [
        pl.BlockSpec((bb, kt), lambda i, j, k: (i, k)),     # rim tile
        pl.BlockSpec((kt, bn), lambda i, j, k: (k, j)),     # basis tile
    ]
    out_spec = pl.BlockSpec((bb, bn), lambda i, j, k: (i, j))

    if nk == 1:
        kernel = _matmul_kernel_single
        scratch = []
    else:
        kernel = _matmul_kernel
        scratch = [pltpu.VMEM((bb, bn), jnp.float32)]

    out = pl.pallas_call(
        kernel,
        out_shape=jax.ShapeDtypeStruct((b_pad, n_pad), out_dtype),
        grid=grid,
        in_specs=in_specs,
        out_specs=out_spec,
        scratch_shapes=scratch,
        compiler_params=pltpu.CompilerParams(
            dimension_semantics=("parallel", "parallel", "arbitrary"),
            vmem_limit_bytes=vmem_limit,
        ),
    )(rim, basis)

    return out[:B, :n_frames]


# ------------------------------ public API --------------------------------- #

def fourier_signal(mag: jax.Array, phase: jax.Array, n_frames: int, *,
                   block_b: int = 256, block_n: int = 512, block_k: int = 2048,
                   basis_dtype=jnp.float32) -> jax.Array:
    assert mag.ndim == 2 and phase.ndim == 2 and mag.shape == phase.shape
    assert block_b % 8 == 0 and block_n % 128 == 0 and block_k % 128 == 0

    B, n_bins = mag.shape
    n_full = n_frames // 2 + 1
    if n_bins > n_full:                    # irfft(n=n_frames) ignores extra bins
        mag, phase, n_bins = mag[:, :n_full], phase[:, :n_full], n_full

    # ---- padded / tiled sizes (lane & sublane aligned) ----
    k_pad = _round_up(max(2 * n_bins, 128), 128)   # packed cos|sin contraction
    n_pad = _round_up(n_frames, 128)

    capacity = _vmem_capacity_bytes()
    budget = int(0.6 * capacity)                   # target tile working set
    elt_b = jnp.dtype(basis_dtype).itemsize
    elt_o = jnp.dtype(mag.dtype).itemsize

    # Batch tile: large for arithmetic intensity, but avoid over-padding
    # (e.g. B=136 with block_b=128 picks bb=72, not 128 -> b_pad=144, not 256).
    b8 = _round_up(max(B, 1), 8)
    bb = min(block_b, b8)
    while bb > 8 and (_round_up(b8, bb) - b8) * 4 > b8:    # >25% padding waste
        bb -= 8
    b_pad = _round_up(b8, bb)

    bn = _largest_div_tile(n_pad, block_n)
    kt = _largest_div_tile(k_pad, block_k)

    def _ws(bb_, kt_, bn_):
        # double-buffered rim + basis + out tiles, plus the f32 accumulator
        return (2 * (bb_ * kt_ * elt_b + kt_ * bn_ * elt_b + bb_ * bn_ * elt_o)
                + bb_ * bn_ * 4)

    # Shrink tiles until the working set fits the VMEM budget (v7x: 64 MiB/TC).
    while _ws(bb, kt, bn) > budget:
        if kt > 128:
            kt = _largest_div_tile(k_pad, kt - 128)
        elif bn > 128:
            bn = _largest_div_tile(n_pad, bn - 128)
        elif bb > 8:
            bb -= 8
            b_pad = _round_up(b8, bb)
        else:
            break

    # v7x has 2 TensorCores: expose at least 2 tiles along a "parallel" axis.
    if (b_pad // bb) * (n_pad // bn) < 2:
        if b8 >= 16:
            bb = _round_up(b8 // 2, 8)
            b_pad = _round_up(b8, bb)
        elif n_pad >= 256:
            bn = _largest_div_tile(n_pad, n_pad // 2)

    vmem_limit = int(min(max(_ws(bb, kt, bn) + (8 << 20), 32 << 20),
                         int(0.85 * capacity)))

    basis = _fused_basis(n_frames, n_bins, k_pad, n_pad,
                         jnp.dtype(basis_dtype).name)

    return _fourier_signal_impl(
        mag, phase, basis,
        n_frames=n_frames, n_bins=n_bins, b_pad=b_pad, n_pad=n_pad,
        k_pad=k_pad, bb=bb, bn=bn, kt=kt, vmem_limit=vmem_limit)


def fourier_signal_ref(mag, phase, n_frames):
    x = (mag * n_frames) * jnp.exp(1j * phase.astype(jnp.complex64))
    return jnp.fft.irfft(x, n=n_frames, axis=1).astype(mag.dtype)


if __name__ == "__main__":
    n_frames = 64
    n_bins = n_frames // 2 + 1          # 33
    B = 16

    key = jax.random.PRNGKey(0)
    k_mag, k_phase = jax.random.split(key)
    mag = jax.random.uniform(k_mag, (B, n_bins), dtype=jnp.float32)
    phase = jax.random.uniform(
        k_phase, (B, n_bins), dtype=jnp.float32,
        minval=-math.pi, maxval=math.pi)

    out = fourier_signal(mag, phase, n_frames=n_frames)
    out = jax.block_until_ready(out)

    ref = fourier_signal_ref(mag, phase, n_frames)
    assert out.shape == (B, n_frames)
    assert jnp.allclose(out, ref, atol=1e-3, rtol=1e-3), "mismatch vs irfft reference"

    print("KERNEL_OK")
</pallas_src>

<mosaic_0001>
module attributes {stable_mosaic.version = 11 : i64} {
  func.func @_matmul_kernel_single(%arg0: i32, %arg1: i32, %arg2: i32, %arg3: memref<8x128xf32, #tpu.memory_space<vmem>>, %arg4: memref<128x128xf32, #tpu.memory_space<vmem>>, %arg5: memref<8x128xf32, #tpu.memory_space<vmem>>) attributes {dimension_semantics = [#tpu.dimension_semantics<parallel>, #tpu.dimension_semantics<parallel>, #tpu.dimension_semantics<arbitrary>], iteration_bounds = array<i64: 2, 1, 1>, scalar_prefetch = 0 : i64, scratch_operands = 0 : i64, tpu.core_type = #tpu.core_type<tc>, window_params = [{transform_indices = @transform_0, window_bounds = array<i64: 8, 128>}, {transform_indices = @transform_1, window_bounds = array<i64: 128, 128>}, {transform_indices = @transform_2, window_bounds = array<i64: 8, 128>}]} {
    %c0 = arith.constant 0 : index
    %c0_0 = arith.constant 0 : index
    %0 = vector.load %arg3[%c0, %c0_0] : memref<8x128xf32, #tpu.memory_space<vmem>>, vector<8x128xf32>
    %c0_1 = arith.constant 0 : index
    %c0_2 = arith.constant 0 : index
    %1 = vector.load %arg4[%c0_1, %c0_2] : memref<128x128xf32, #tpu.memory_space<vmem>>, vector<128x128xf32>
    %cst = arith.constant dense<0.000000e+00> : vector<8x128xf32>
    %2 = tpu.matmul %0, %1, %cst {dimension_numbers = #tpu.dot_dimension_numbers<[1], [0], [0], [1], [0, 0, 1, 1], [], []>} : vector<8x128xf32>, vector<128x128xf32>, vector<8x128xf32> -> vector<8x128xf32>
    %c0_3 = arith.constant 0 : index
    %c0_4 = arith.constant 0 : index
    %3 = vector.load %arg5[%c0_3, %c0_4] : memref<8x128xf32, #tpu.memory_space<vmem>>, vector<8x128xf32>
    tpu.vector_store %arg5[%c0_3, %c0_4], %2 {strides = array<i32>} : memref<8x128xf32, #tpu.memory_space<vmem>>, vector<8x128xf32>,
    return
  }
  func.func @transform_0(%arg0: i32, %arg1: i32, %arg2: i32) -> (i32, i32) {
    %c0_i32 = arith.constant 0 : i32
    return %arg0, %arg2 : i32, i32
  }
  func.func @transform_1(%arg0: i32, %arg1: i32, %arg2: i32) -> (i32, i32) {
    %c0_i32 = arith.constant 0 : i32
    return %arg2, %arg1 : i32, i32
  }
  func.func @transform_2(%arg0: i32, %arg1: i32, %arg2: i32) -> (i32, i32) {
    %c0_i32 = arith.constant 0 : i32
    return %arg0, %arg1 : i32, i32
  }
}

</mosaic_0001>

<llo_original>
// kernel: _fourier_signal_impl.1
$region0: #{_fourier_signal_impl.1}
  #allocation0 [shape = 'u32[]', space=smem, size = 0x4, offset = 0x4, fixed_abs, tag = 'smem constant byte address 0x4 - core index']
  #allocation1 [shape = 'u32[144,128]{1,0:T(1,128)}', space=vmem, size = 0x12000, scoped, tag = 'internal scratch']
  %s0 = inlined_call_operand.vmem [shape: f32[16,128], index: 0, kind: input, shape index: {}]
  %s1 = inlined_call_operand.hbm [shape: f32[128,128], index: 1, kind: input, shape index: {}]
  %s2 = inlined_call_operand.hbm [shape: f32[16,128], index: 2, kind: output, shape index: {}]
  %s3 = sld [smem:[#allocation0]]
  $region45: #{_fourier_signal_impl.1} parent=0
    _
  %s5 = ssub.s32 1, %s3
  %s6 = scalar_select 0, %s5, %s3
  $region1: #{_fourier_signal_impl.1} parent=0
    #allocation2 [shape = 'u8[65536]{0}', space=vmem, size = 0x10000, scoped, tag = 'input window, operand 1, single buffered']
    #allocation3 [shape = 's32[2]{0}', space=sflag, size = 0x8, scoped, tag = 'scoped memory for _fourier_signal_impl.1']
    #allocation4 [shape = 's32[2]{0}', space=sflag, size = 0x8, scoped, tag = 'scoped memory for _fourier_signal_impl.1']
    #allocation5 [shape = 'u8[8192]{0}', space=vmem, size = 0x2000, scoped, tag = 'output window, operand 0']
    %7 = vsyncpa [#allocation3], 0
    %8 = vsyncpa [#allocation4], 0
    %s9 = scalar_lea.sflag [#allocation4], 1
    %10 = vsyncpa %s9, 0
    loop: start=0, step=1, limit=4
    $region2: #{_fourier_signal_impl.1} parent=1 // loop_pre_header
      _
    $region3: #{_fourier_signal_impl.1} parent=1 // loop_header
      %s12 = sphi 0, %s16
      %p13 = scmp.ge.s32.totalorder %s12, 4
      %s19 = sphi 0, %s38
      %s20 = sphi 0, %s34
      %s21 = sphi 0, %s30
      %s22 = sphi 0, %s19
      %s23 = sphi 0, %s20
      %s24 = sphi 0, %s21
      %s25 = sphi 0, %s22
      %s26 = sphi 0, %s23
      %s27 = sphi 0, %s24
      %s43 = sphi 0, %s45
      %s46 = sphi 0, %s43
      %s47 = sphi 0, %s46
      %s63 = sphi 0, %s47
      %s71 = sphi 0, %s73
      %s74 = sphi 0, %s71
      %s75 = sphi 0, %s74
      %s91 = sphi 0, %s75
      %s99 = sphi 0, %s101
      %s102 = sphi 0, %s99
      %s103 = sphi 0, %s102
      %s119 = sphi 0, %s103
    $region4: #{_fourier_signal_impl.1} parent=1 // loop_header_branch
      %15 = sbr.rel (%p13) target = $region8
    $region5: #{_fourier_signal_impl.1} parent=1 // loop_body
      %s17 = ssub.s32 %s12, 1
      %s18 = ssub.s32 %s12, 2
      %s28 = sadd.s32 1, %s21
      %p29 = scmp.ge.s32.totalorder %s28, 1
      %s30 = scalar_select %p29, 0, %s28
      %s31 = sadd.s32 1, %s20
      %s32 = scalar_select %p29, %s31, %s20
      %p33 = scmp.ge.s32.totalorder %s32, 1
      %s34 = scalar_select %p33, 0, %s32
      %s35 = sadd.s32 1, %s19
      %s36 = scalar_select %p33, %s35, %s19
      %p37 = scmp.ge.s32.totalorder %s36, 2
      %s38 = scalar_select %p37, 0, %s36
      %s39 = ssub.s32 %s19, %s38
      %s40 = ssub.s32 %s21, %s30
      %s41 = sor.u32 %s39, %s40
      %p42 = scmp.eq.s32.totalorder %s41, 0
      %s44 = sadd.s32 %s43, 1
      %s45 = scalar_select %p42, %s43, %s44
      %p48 = pneg %p42
      %p49 = scmp.eq.s32.totalorder %s12, 1
      %p50 = por %p48, %p49
      %p51 = scmp.ne.s32.totalorder %s43, %s46
      %p52 = scmp.eq.s32.totalorder %s12, 0
      %p53 = por %p51, %p52
      %p54 = scmp.ne.s32.totalorder %s43, %s46
      %p55 = scmp.eq.s32.totalorder %s17, 1
      %p56 = por %p54, %p55
      %p57 = scmp.ne.s32.totalorder %s46, %s47
      %p58 = scmp.eq.s32.totalorder %s17, 0
      %p59 = por %p57, %p58
      %p60 = scmp.ne.s32.totalorder %s46, %s47
      %p61 = scmp.eq.s32.totalorder %s18, 1
      %p62 = por %p60, %p61
      %p64 = scmp.ne.s32.totalorder %s47, %s63
      %p65 = scmp.eq.s32.totalorder %s18, 0
      %p66 = por %p64, %p65
      %s67 = ssub.s32 %s21, %s30
      %s68 = ssub.s32 %s20, %s34
      %s69 = sor.u32 %s67, %s68
      %p70 = scmp.eq.s32.totalorder %s69, 0
      %s72 = sadd.s32 %s71, 1
      %s73 = scalar_select %p70, %s71, %s72
      %p76 = pneg %p70
      %p77 = scmp.eq.s32.totalorder %s12, 1
      %p78 = por %p76, %p77
      %p79 = scmp.ne.s32.totalorder %s71, %s74
      %p80 = scmp.eq.s32.totalorder %s12, 0
      %p81 = por %p79, %p80
      %p82 = scmp.ne.s32.totalorder %s71, %s74
      %p83 = scmp.eq.s32.totalorder %s17, 1
      %p84 = por %p82, %p83
      %p85 = scmp.ne.s32.totalorder %s74, %s75
      %p86 = scmp.eq.s32.totalorder %s17, 0
      %p87 = por %p85, %p86
      %p88 = scmp.ne.s32.totalorder %s74, %s75
      %p89 = scmp.eq.s32.totalorder %s18, 1
      %p90 = por %p88, %p89
      %p92 = scmp.ne.s32.totalorder %s75, %s91
      %p93 = scmp.eq.s32.totalorder %s18, 0
      %p94 = por %p92, %p93
      %s95 = ssub.s32 %s19, %s38
      %s96 = ssub.s32 %s20, %s34
      %s97 = sor.u32 %s95, %s96
      %p98 = scmp.eq.s32.totalorder %s97, 0
      %s100 = sadd.s32 %s99, 1
      %s101 = scalar_select %p98, %s99, %s100
      %p104 = pneg %p98
      %p105 = scmp.eq.s32.totalorder %s12, 1
      %p106 = por %p104, %p105
      %p107 = scmp.ne.s32.totalorder %s99, %s102
      %p108 = scmp.eq.s32.totalorder %s12, 0
      %p109 = por %p107, %p108
      %p110 = scmp.ne.s32.totalorder %s99, %s102
      %p111 = scmp.eq.s32.totalorder %s17, 1
      %p112 = por %p110, %p111
      %p113 = scmp.ne.s32.totalorder %s102, %s103
      %p114 = scmp.eq.s32.totalorder %s17, 0
      %p115 = por %p113, %p114
      %p116 = scmp.ne.s32.totalorder %s102, %s103
      %p117 = scmp.eq.s32.totalorder %s18, 1
      %p118 = por %p116, %p117
      %p120 = scmp.ne.s32.totalorder %s103, %s119
      %p121 = scmp.eq.s32.totalorder %s18, 0
      %p122 = por %p120, %p121
      %p123 = scmp.le.s32.totalorder 1, %s12
      %p124 = scmp.lt.s32.totalorder %s12, 3
      %p125 = pnand %p123, %p124
      %p126 = pneg %p125
      // Predicated region
      $region9: #{_fourier_signal_impl.1} parent=5 // pred_check
        _
      $region10: #{_fourier_signal_impl.1} parent=5 // pred_check_branch
        %128 = sbr.rel (%p125) target = $region12
      $region11: #{_fourier_signal_impl.1} parent=5 // pred_region
        %s129 = ssub.s32 %s12, 1
        // Predicated region
        $region13: #{_fourier_signal_impl.1} parent=11 // pred_check
          %p130 = pneg %p87
        $region14: #{_fourier_signal_impl.1} parent=11 // pred_check_branch
          %132 = sbr.rel (%p130) target = $region16
        $region15: #{_fourier_signal_impl.1} parent=11 // pred_region
          %s133 = smul.u32 16, %s24
          %s135 = ssub.s32 2048, 2048
          %136 = vsyncadd [#allocation3], %s135
          %s137 = sadd.s32 %s23, %s133
          %s138 = smul.addr %s137, 128
          %s139 = scalar_lea.hbm %s1, %s138
          %s140 = sshll.u32 [#allocation2], 4
          %s141 = int_to_ptr.vmem [resolvable:$true] %s140
          %146 = dma.hbm_to_vmem [thread:$0]  %s139, 2048, %s141, [#allocation3], 128, 128, 8
        $region16: #{_fourier_signal_impl.1} parent=11 // pred_fallthru
          _
      $region12: #{_fourier_signal_impl.1} parent=5 // pred_fallthru
        _
      %p147 = scmp.lt.s32.totalorder %s12, 2
      // Predicated region
      $region17: #{_fourier_signal_impl.1} parent=5 // pred_check
        %p148 = pneg %p147
      $region18: #{_fourier_signal_impl.1} parent=5 // pred_check_branch
        %150 = sbr.rel (%p148) target = $region20
      $region19: #{_fourier_signal_impl.1} parent=5 // pred_region
        // Predicated region
        $region21: #{_fourier_signal_impl.1} parent=19 // pred_check
          %p151 = pneg %p53
        $region22: #{_fourier_signal_impl.1} parent=19 // pred_check_branch
          %153 = sbr.rel (%p151) target = $region24
        $region23: #{_fourier_signal_impl.1} parent=19 // pred_region
          %p154 = scmp.lt.s32.totalorder %s19, 1
          %s155 = scalar_select %p154, %s19, 1
          %p156 = scmp.lt.s32.totalorder %s21, 0
          %s157 = scalar_select %p156, %s21, 0
          %s158 = sadd.s32 %s157, %s155
          %s159 = smul.addr %s158, 8
          %s160 = scalar_lea.vmem %s0, %s159
        $region24: #{_fourier_signal_impl.1} parent=19 // pred_fallthru
          _
      $region20: #{_fourier_signal_impl.1} parent=5 // pred_fallthru
        _
      %p161 = scmp.le.s32.totalorder 1, %s12
      %p162 = scmp.lt.s32.totalorder %s12, 3
      %p163 = pnand %p161, %p162
      %p164 = pneg %p163
      // Predicated region
      $region25: #{_fourier_signal_impl.1} parent=5 // pred_check
        _
      $region26: #{_fourier_signal_impl.1} parent=5 // pred_check_branch
        %166 = sbr.rel (%p163) target = $region28
      $region27: #{_fourier_signal_impl.1} parent=5 // pred_region
        %s167 = ssub.s32 %s12, 1
        // Predicated region
        $region29: #{_fourier_signal_impl.1} parent=27 // pred_check
          %p168 = pneg %p87
        $region30: #{_fourier_signal_impl.1} parent=27 // pred_check_branch
          %170 = sbr.rel (%p168) target = $region32
        $region31: #{_fourier_signal_impl.1} parent=27 // pred_region
          %171 = dma.done [#allocation3], 2048
        $region32: #{_fourier_signal_impl.1} parent=27 // pred_fallthru
          _
        %p172 = scmp.lt.s32.totalorder %s22, 1
        %s173 = scalar_select %p172, %s22, 1
        %p174 = scmp.lt.s32.totalorder %s24, 0
        %s175 = scalar_select %p174, %s24, 0
        %s176 = sadd.s32 %s175, %s173
        %s177 = smul.addr %s176, 8
        %s178 = scalar_lea.vmem %s0, %s177
        %p179 = pneg %p59
        %p180 = pneg %p56
        %p181 = pneg %p87
        %p182 = pneg %p84
        %p183 = pneg %p115
        %p184 = pneg %p112
        %s185 = sand.u32 %s102, 1
        %s186 = scalar_lea.sflag [#allocation4], %s185
        %s187 = sand.u32 %s102, 1
        %s188 = smul.addr %s187, 8
        %s189 = scalar_lea.vmem [#allocation5], %s188
        %p190 = scmp.lt.s32.totalorder %s22, 1
        %s191 = scalar_select %p190, %s22, 1
        %p192 = scmp.lt.s32.totalorder %s24, 0
        %s193 = scalar_select %p192, %s24, 0
        %s194 = sadd.s32 %s193, %s191
        %s195 = smul.addr %s194, 8
        %s196 = scalar_lea.vmem %s0, %s195
        %s197 = smul.u32 16, %s24
        %v198 = vld [vmem:[%s196] sm:$0xff]
        %v199 = vld [vmem:[#allocation2] sm:$0xff]
        %v200 = vld [vmem:[#allocation2 + $0x8] sm:$0xff]
        %v201 = vld [vmem:[#allocation2 + $0x10] sm:$0xff]
        %v202 = vld [vmem:[#allocation2 + $0x18] sm:$0xff]
        %v203 = vld [vmem:[#allocation2 + $0x20] sm:$0xff]
        %v204 = vld [vmem:[#allocation2 + $0x28] sm:$0xff]
        %v205 = vld [vmem:[#allocation2 + $0x30] sm:$0xff]
        %v206 = vld [vmem:[#allocation2 + $0x38] sm:$0xff]
        %v207 = vld [vmem:[#allocation2 + $0x40] sm:$0xff]
        %v208 = vld [vmem:[#allocation2 + $0x48] sm:$0xff]
        %v209 = vld [vmem:[#allocation2 + $0x50] sm:$0xff]
        %v210 = vld [vmem:[#allocation2 + $0x58] sm:$0xff]
        %v211 = vld [vmem:[#allocation2 + $0x60] sm:$0xff]
        %v212 = vld [vmem:[#allocation2 + $0x68] sm:$0xff]
        %v213 = vld [vmem:[#allocation2 + $0x70] sm:$0xff]
        %v214 = vld [vmem:[#allocation2 + $0x78] sm:$0xff]
        %215 = vmatprep.subr.mxu0 0.0
        %216 = vmatpush1.msra.mxu0 %v214
        %217 = vmatprep.subr.mxu0 0.0
        %218 = vmatpush1.msra.mxu0 %v213
        %219 = vmatprep.subr.mxu0 0.0
        %220 = vmatpush1.msra.mxu0 %v212
        %221 = vmatprep.subr.mxu0 0.0
        %222 = vmatpush1.msra.mxu0 %v211
        %223 = vmatprep.subr.mxu0 0.0
        %224 = vmatpush1.msra.mxu0 %v210
        %225 = vmatprep.subr.mxu0 0.0
        %226 = vmatpush1.msra.mxu0 %v209
        %227 = vmatprep.subr.mxu0 0.0
        %228 = vmatpush1.msra.mxu0 %v208
        %229 = vmatprep.subr.mxu0 0.0
        %230 = vmatpush1.msra.mxu0 %v207
        %231 = vmatprep.subr.mxu0 0.0
        %232 = vmatpush1.msra.mxu0 %v206
        %233 = vmatprep.subr.mxu0 0.0
        %234 = vmatpush1.msra.mxu0 %v205
        %235 = vmatprep.subr.mxu0 0.0
        %236 = vmatpush1.msra.mxu0 %v204
        %237 = vmatprep.subr.mxu0 0.0
        %238 = vmatpush1.msra.mxu0 %v203
        %239 = vmatprep.subr.mxu0 0.0
        %240 = vmatpush1.msra.mxu0 %v202
        %241 = vmatprep.subr.mxu0 0.0
        %242 = vmatpush1.msra.mxu0 %v201
        %243 = vmatprep.subr.mxu0 0.0
        %244 = vmatpush1.msra.mxu0 %v200
        %245 = vmatprep.subr.mxu0 0.0
        %246 = vmatpush1.msra.mxu0 %v199
        %247 = vmatprep.subr.mxu0 0.0
        %248 = vmatpush2.msra.mxu0 0.0
        %249 = vmatprep.subr.mxu0 0.0
        %250 = vmatpush2.msra.mxu0 0.0
        %251 = vmatprep.subr.mxu0 0.0
        %252 = vmatpush2.msra.mxu0 0.0
        %253 = vmatprep.subr.mxu0 0.0
        %254 = vmatpush2.msra.mxu0 0.0
        %255 = vmatprep.subr.mxu0 0.0
        %256 = vmatpush2.msra.mxu0 0.0
        %257 = vmatprep.subr.mxu0 0.0
        %258 = vmatpush2.msra.mxu0 0.0
        %259 = vmatprep.subr.mxu0 0.0
        %260 = vmatpush2.msra.mxu0 0.0
        %261 = vmatprep.subr.mxu0 0.0
        %262 = vmatpush2.msra.mxu0 0.0
        %263 = vmatprep.subr.mxu0 0.0
        %264 = vmatpush2.msra.mxu0 0.0
        %265 = vmatprep.subr.mxu0 0.0
        %266 = vmatpush2.msra.mxu0 0.0
        %267 = vmatprep.subr.mxu0 0.0
        %268 = vmatpush2.msra.mxu0 0.0
        %269 = vmatprep.subr.mxu0 0.0
        %270 = vmatpush2.msra.mxu0 0.0
        %271 = vmatprep.subr.mxu0 0.0
        %272 = vmatpush2.msra.mxu0 0.0
        %273 = vmatprep.subr.mxu0 0.0
        %274 = vmatpush2.msra.mxu0 0.0
        %275 = vmatprep.subr.mxu0 0.0
        %276 = vmatpush2.msra.mxu0 0.0
        %277 = vmatprep.subr.mxu0 0.0
        %278 = vmatpush2.msra.mxu0 0.0
        %279 = vmatprep.mubr.f32.mxu0 0.0
        %280 = vmatmul.mubr.f32.gmra.mxu0 %v198
        %v281 = vpop.f32.mrf.mxu0
        %v282 = vadd.f32 0.0, %v281
        %v283 = vpop.f32.mrf.mxu0
        %284 = vdwg.mxu0
        %285 = vst [vmem:[%s189] sm:$0xff] %v282
        %s286 = sand.u32 %s102, 1
        %s287 = scalar_lea.sflag [#allocation4], %s286
        %s288 = sand.u32 %s102, 1
        %s289 = smul.addr %s288, 8
        %s290 = scalar_lea.vmem [#allocation5], %s289
        // Predicated region
        $region33: #{_fourier_signal_impl.1} parent=27 // pred_check
          %p291 = pneg %p112
        $region34: #{_fourier_signal_impl.1} parent=27 // pred_check_branch
          %293 = sbr.rel (%p291) target = $region36
        $region35: #{_fourier_signal_impl.1} parent=27 // pred_region
          %s295 = ssub.s32 128, 128
          %296 = vsyncadd %s287, %s295
          %s297 = sadd.s32 %s23, %s22
          %s298 = smul.addr %s297, 128
          %s299 = scalar_lea.hbm %s2, %s298
          %s301 = sshll.u32 %s290, 4
          %s302 = int_to_ptr.vmem [resolvable:$true] %s301
          %304 = dma.vmem_to_hbm [thread:$0]  %s302, 128, %s299, %s287
        $region36: #{_fourier_signal_impl.1} parent=27 // pred_fallthru
          _
      $region28: #{_fourier_signal_impl.1} parent=5 // pred_fallthru
        _
      %p305 = scmp.le.s32.totalorder 2, %s12
      // Predicated region
      $region37: #{_fourier_signal_impl.1} parent=5 // pred_check
        %p306 = pneg %p305
      $region38: #{_fourier_signal_impl.1} parent=5 // pred_check_branch
        %308 = sbr.rel (%p306) target = $region40
      $region39: #{_fourier_signal_impl.1} parent=5 // pred_region
        %s309 = ssub.s32 %s12, 2
        // Predicated region
        $region41: #{_fourier_signal_impl.1} parent=39 // pred_check
          %p310 = pneg %p118
        $region42: #{_fourier_signal_impl.1} parent=39 // pred_check_branch
          %312 = sbr.rel (%p310) target = $region44
        $region43: #{_fourier_signal_impl.1} parent=39 // pred_region
          %s313 = sand.u32 %s103, 1
          %s314 = scalar_lea.sflag [#allocation4], %s313
          %s315 = sand.u32 %s103, 1
          %s316 = smul.addr %s315, 8
          %s317 = scalar_lea.vmem [#allocation5], %s316
          %318 = dma.done %s314, 128
        $region44: #{_fourier_signal_impl.1} parent=39 // pred_fallthru
          _
      $region40: #{_fourier_signal_impl.1} parent=5 // pred_fallthru
        _
    $region6: #{_fourier_signal_impl.1} parent=1 // loop_footer
      %s16 = sadd.s32 1, %s12
    $region7: #{_fourier_signal_impl.1} parent=1 // loop_footer_branch
      %11 = sbr.rel target = $region3
    $region8: #{_fourier_signal_impl.1} parent=1 // loop_exit
      _
    %319 = vsyncpa [#allocation3], 1
    %s320 = scalar_lea.sflag [#allocation3], 1
    %321 = vsyncpa %s320, 1
    %322 = vsyncpa [#allocation4], 1
    %s323 = scalar_lea.sflag [#allocation4], 1
    %324 = vsyncpa %s323, 1

</llo_original>
